<compile_context>
chip_gen: v5e
topology: v5e:2x2
jax: 0.10.0
libtpu: 0.0.40
codegen_flags: <defaults>
</compile_context>

<pallas_src>
import functools

import jax
import jax.numpy as jnp
from jax.experimental import pallas as pl
from jax.experimental.pallas import tpu as pltpu

HIDDEN = 64
DROP_P = 0.5
_MAX_TB = 2048           # batch-tile cap (rows); footprint stays low-single-MiB
_SPLIT_THRESHOLD = 512   # batches above this get >=2 grid steps (v7x: 2 TCs)


def _cdiv(a, b):
    return -(-a // b)


def _round_up(x, m):
    return _cdiv(x, m) * m


def _pick_tb(batch, max_tb):
    """Choose the batch tile.

    * As large as possible (amortizes ~0.35 us per-grid-step overhead).
    * Multiple of 16 rows when the batch spans several tiles.
    * == batch for a single-tile call (block == full dim, always layout-legal,
      no padding even for tiny/odd batches).
    * For large batches, capped so the grid has >= 2 steps (v7x megacore).
    """
    max_tb = max(16, min(max_tb, _MAX_TB))
    if batch > _SPLIT_THRESHOLD:
        max_tb = min(max_tb, _round_up(_cdiv(batch, 2), 16))
    if batch <= max_tb:
        return batch
    n_tiles = _cdiv(batch, max_tb)
    return _round_up(_cdiv(batch, n_tiles), 16)


def _mlp_kernel(seed_ref, obs_ref, w1_ref, b1_ref, w2_ref, b2_ref,
                w3_ref, b3_ref, out_ref, *, training):
    # obs arrives as f32 straight from HBM; cast to bf16 on the VPU here so the
    # wrapper never makes a separate cast pass over obs in HBM.
    x = obs_ref[...].astype(jnp.bfloat16)

    # ---- Linear(in_dim, 64) + ReLU : bf16 operands, f32 accum + epilogue ----
    h = jnp.dot(x, w1_ref[...], preferred_element_type=jnp.float32)
    h = jnp.maximum(h + b1_ref[...], 0.0)

    if training:
        # Per-tile seed so different batch tiles never share a mask (and the
        # result is deterministic regardless of which TC runs which tile).
        # The 1/(1-p) keep-scale is folded into w2/w3 in the wrapper, so
        # dropout here is a pure select. Ragged-tile garbage rows consume PRNG
        # bits and produce garbage outputs, but their stores are masked.
        pltpu.prng_seed(seed_ref[0] + pl.program_id(0))
        thresh = jnp.uint32(int(DROP_P * (2 ** 32)))

        def _keep_mask(shape):
            bits = pltpu.prng_random_bits(shape)
            if bits.dtype != jnp.uint32:          # guard signed interpretation
                bits = pltpu.bitcast(bits, jnp.uint32)
            return bits >= thresh                 # P(keep) = 1 - DROP_P

        h = jnp.where(_keep_mask(h.shape), h, 0.0)

    # ---- Linear(64, 64) (no activation in the PyTorch module) ----
    h = jnp.dot(h.astype(jnp.bfloat16), w2_ref[...],
                preferred_element_type=jnp.float32) + b2_ref[...]

    if training:
        h = jnp.where(_keep_mask(h.shape), h, 0.0)

    # ---- Linear(64, out_dim) + Tanh ----
    h = jnp.dot(h.astype(jnp.bfloat16), w3_ref[...],
                preferred_element_type=jnp.float32)
    out_ref[...] = jnp.tanh(h + b3_ref[...])


def init_params(key, in_dim, out_dim):
    """Deterministic parameter init (PyTorch-Linear-style uniform ranges)."""
    ks = jax.random.split(key, 6)

    def lin(kw, kb, fan_in, fan_out):
        bound = 1.0 / jnp.sqrt(jnp.float32(fan_in))
        w = jax.random.uniform(kw, (fan_in, fan_out), jnp.float32, -bound, bound)
        b = jax.random.uniform(kb, (1, fan_out), jnp.float32, -bound, bound)
        return w, b

    w1, b1 = lin(ks[0], ks[1], in_dim, HIDDEN)
    w2, b2 = lin(ks[2], ks[3], HIDDEN, HIDDEN)
    w3, b3 = lin(ks[4], ks[5], HIDDEN, out_dim)
    log_std = jnp.ones((out_dim,), jnp.float32) * -4.0   # unused by forward()
    return dict(w1=w1, b1=b1, w2=w2, b2=b2, w3=w3, b3=b3, log_std=log_std)


def network_forward(obs, params, *, training=False, seed=0, batch_tile=_MAX_TB):
    """obs: (batch, in_dim) float32 -> (batch, out_dim) float32."""
    batch, in_dim = obs.shape
    out_dim = params["w3"].shape[1]

    tb = _pick_tb(batch, batch_tile)
    grid = (_cdiv(batch, tb),)   # ragged last tile handled by Pallas (no jnp.pad pass)

    # Weights to bf16 (native MXU operand width); biases stay f32.
    w1 = params["w1"]
    w2 = params["w2"]
    w3 = params["w3"]
    if training:
        # Fold the dropout keep-scale into the following layer's weights:
        # (mask * s * h) @ W == (mask * h) @ (s * W).
        keep_scale = 1.0 / (1.0 - DROP_P)
        w2 = w2 * keep_scale
        w3 = w3 * keep_scale
    w1 = w1.astype(jnp.bfloat16)
    w2 = w2.astype(jnp.bfloat16)
    w3 = w3.astype(jnp.bfloat16)
    b1 = params["b1"].astype(jnp.float32)
    b2 = params["b2"].astype(jnp.float32)
    b3 = params["b3"].astype(jnp.float32)

    obs = obs.astype(jnp.float32)   # streamed as-is; bf16 cast happens in-kernel

    kernel = functools.partial(_mlp_kernel, training=training)
    seed_arr = jnp.array([seed], dtype=jnp.int32)

    # Weights/biases: same block index every step -> VMEM-resident, no re-DMA.
    def resident(shape):
        return pl.BlockSpec(shape, lambda i, s: (0, 0))

    grid_spec = pltpu.PrefetchScalarGridSpec(
        num_scalar_prefetch=1,          # seed -> SMEM, passed to index_maps
        grid=grid,
        in_specs=[
            pl.BlockSpec((tb, in_dim), lambda i, s: (i, 0)),      # obs, streamed
            resident((in_dim, HIDDEN)), resident((1, HIDDEN)),    # w1, b1
            resident((HIDDEN, HIDDEN)), resident((1, HIDDEN)),    # w2, b2
            resident((HIDDEN, out_dim)), resident((1, out_dim)),  # w3, b3
        ],
        out_specs=pl.BlockSpec((tb, out_dim), lambda i, s: (i, 0)),
    )

    flops = 2 * batch * (in_dim * HIDDEN + HIDDEN * HIDDEN + HIDDEN * out_dim)
    bytes_accessed = (
        batch * in_dim * 4                      # obs read (f32, no extra pass)
        + batch * out_dim * 4                   # output write (f32)
        + (in_dim * HIDDEN + HIDDEN * HIDDEN + HIDDEN * out_dim) * 2  # bf16 weights
        + (2 * HIDDEN + out_dim) * 4)           # f32 biases

    out = pl.pallas_call(
        kernel,
        out_shape=jax.ShapeDtypeStruct((batch, out_dim), jnp.float32),
        grid_spec=grid_spec,
        compiler_params=pltpu.CompilerParams(
            dimension_semantics=("parallel",),   # 2-TC sharding on v7x
            has_side_effects=training,           # PRNG state in training mode
        ),
        cost_estimate=pl.CostEstimate(
            flops=flops,
            transcendentals=batch * out_dim,     # tanh
            bytes_accessed=bytes_accessed),
    )(seed_arr, obs, w1, b1, w2, b2, w3, b3)

    return out


def network_forward_ref(obs, params):
    """Pure-JAX reference, eval mode, numerics matched to the kernel
    (bf16 matmul operands, f32 accumulation/epilogue)."""
    bf = lambda a: a.astype(jnp.bfloat16)
    h = jnp.dot(bf(obs), bf(params["w1"]), preferred_element_type=jnp.float32)
    h = jnp.maximum(h + params["b1"], 0.0)
    h = jnp.dot(bf(h), bf(params["w2"]),
                preferred_element_type=jnp.float32) + params["b2"]
    h = jnp.dot(bf(h), bf(params["w3"]),
                preferred_element_type=jnp.float32) + params["b3"]
    return jnp.tanh(h)


def network_forward_ref_f32(obs, params):
    """Full-precision reference (what the PyTorch module computes in f32)."""
    h = jnp.maximum(obs @ params["w1"] + params["b1"], 0.0)
    h = h @ params["w2"] + params["b2"]
    h = h @ params["w3"] + params["b3"]
    return jnp.tanh(h)


if __name__ == "__main__":
    key = jax.random.PRNGKey(0)
    k_obs, k_par, k_obs2 = jax.random.split(key, 3)

    batch, in_dim, out_dim = 8, 32, 8
    obs = jax.random.normal(k_obs, (batch, in_dim), jnp.float32)
    params = init_params(k_par, in_dim, out_dim)

    # Eval-mode forward (dropout = identity), single grid step (tb == batch).
    out = jax.block_until_ready(network_forward(obs, params, training=False))
    assert out.shape == (batch, out_dim)
    ref = network_forward_ref(obs, params)
    assert jnp.allclose(out, ref, atol=1e-4, rtol=1e-4), "mismatch vs bf16 reference"
    ref32 = network_forward_ref_f32(obs, params)
    assert jnp.allclose(out, ref32, atol=3e-2, rtol=3e-2), "mismatch vs f32 reference"

    # Multi-tile grid (3 batch tiles of 32) exercising the pipelined path
    # with VMEM-resident weights.
    batch2 = 96
    obs2 = jax.random.normal(k_obs2, (batch2, in_dim), jnp.float32)
    out2 = jax.block_until_ready(network_forward(obs2, params, batch_tile=32))
    assert out2.shape == (batch2, out_dim)
    assert jnp.allclose(out2, network_forward_ref(obs2, params),
                        atol=1e-4, rtol=1e-4), "mismatch on gridded batch"

    # Ragged last tile (no wrapper-side pad pass): 90 rows, 3 tiles of 32.
    batch3 = 90
    out3 = jax.block_until_ready(
        network_forward(obs2[:batch3], params, batch_tile=32))
    assert out3.shape == (batch3, out_dim)
    assert jnp.allclose(out3, network_forward_ref(obs2[:batch3], params),
                        atol=1e-4, rtol=1e-4), "mismatch on ragged batch"

    # Training-mode smoke test (TPU hardware PRNG dropout, per-tile seeds).
    # Gated on a real TPU backend: pltpu.prng_seed has no CPU/interpret lowering.
    # TODO(synk): training dropout cannot bit-match torch's RNG stream.
    if jax.default_backend() == "tpu":
        out_tr = jax.block_until_ready(
            network_forward(obs2, params, training=True, seed=123, batch_tile=32))
        assert out_tr.shape == (batch2, out_dim)
        assert bool(jnp.all(jnp.isfinite(out_tr)))

    print("KERNEL_OK")
</pallas_src>

<mosaic_0001>
module attributes {stable_mosaic.version = 11 : i64} {
  func.func @_mlp_kernel(%arg0: i32, %arg1: memref<1xi32, #tpu.memory_space<smem>>, %arg2: memref<8x32xf32, #tpu.memory_space<vmem>>, %arg3: memref<32x64xbf16, #tpu.memory_space<vmem>>, %arg4: memref<1x64xf32, #tpu.memory_space<vmem>>, %arg5: memref<64x64xbf16, #tpu.memory_space<vmem>>, %arg6: memref<1x64xf32, #tpu.memory_space<vmem>>, %arg7: memref<64x8xbf16, #tpu.memory_space<vmem>>, %arg8: memref<1x8xf32, #tpu.memory_space<vmem>>, %arg9: memref<8x8xf32, #tpu.memory_space<vmem>>) attributes {dimension_semantics = [#tpu.dimension_semantics<parallel>], iteration_bounds = array<i64: 1>, scalar_prefetch = 1 : i64, scratch_operands = 0 : i64, tpu.core_type = #tpu.core_type<tc>, window_params = [{transform_indices = @transform_0, window_bounds = array<i64: 8, 32>}, {pipeline_mode = #tpu.pipeline_mode<synchronous>, transform_indices = @transform_1, window_bounds = array<i64: 32, 64>}, {pipeline_mode = #tpu.pipeline_mode<synchronous>, transform_indices = @transform_2, window_bounds = array<i64: 1, 64>}, {pipeline_mode = #tpu.pipeline_mode<synchronous>, transform_indices = @transform_3, window_bounds = array<i64: 64, 64>}, {pipeline_mode = #tpu.pipeline_mode<synchronous>, transform_indices = @transform_4, window_bounds = array<i64: 1, 64>}, {pipeline_mode = #tpu.pipeline_mode<synchronous>, transform_indices = @transform_5, window_bounds = array<i64: 64, 8>}, {pipeline_mode = #tpu.pipeline_mode<synchronous>, transform_indices = @transform_6, window_bounds = array<i64: 1, 8>}, {transform_indices = @transform_7, window_bounds = array<i64: 8, 8>}]} {
    %c0 = arith.constant 0 : index
    %c0_0 = arith.constant 0 : index
    %0 = vector.load %arg2[%c0, %c0_0] : memref<8x32xf32, #tpu.memory_space<vmem>>, vector<8x32xf32>
    %1 = arith.truncf %0 : vector<8x32xf32> to vector<8x32xbf16>
    %c0_1 = arith.constant 0 : index
    %c0_2 = arith.constant 0 : index
    %2 = vector.load %arg3[%c0_1, %c0_2] : memref<32x64xbf16, #tpu.memory_space<vmem>>, vector<32x64xbf16>
    %cst = arith.constant dense<0.000000e+00> : vector<8x64xf32>
    %3 = tpu.matmul %1, %2, %cst {dimension_numbers = #tpu.dot_dimension_numbers<[1], [0], [0], [1], [0, 0, 1, 1], [], []>} : vector<8x32xbf16>, vector<32x64xbf16>, vector<8x64xf32> -> vector<8x64xf32>
    %c0_3 = arith.constant 0 : index
    %c0_4 = arith.constant 0 : index
    %4 = vector.load %arg4[%c0_3, %c0_4] : memref<1x64xf32, #tpu.memory_space<vmem>>, vector<1x64xf32>
    %5 = vector.broadcast %4 : vector<1x64xf32> to vector<8x64xf32>
    %6 = arith.addf %3, %5 : vector<8x64xf32>
    %cst_5 = arith.constant 0.000000e+00 : f32
    %7 = vector.broadcast %cst_5 : f32 to vector<8x64xf32>
    %8 = arith.maximumf %6, %7 : vector<8x64xf32>
    %9 = arith.truncf %8 : vector<8x64xf32> to vector<8x64xbf16>
    %c0_6 = arith.constant 0 : index
    %c0_7 = arith.constant 0 : index
    %10 = vector.load %arg5[%c0_6, %c0_7] : memref<64x64xbf16, #tpu.memory_space<vmem>>, vector<64x64xbf16>
    %cst_8 = arith.constant dense<0.000000e+00> : vector<8x64xf32>
    %11 = tpu.matmul %9, %10, %cst_8 {dimension_numbers = #tpu.dot_dimension_numbers<[1], [0], [0], [1], [0, 0, 1, 1], [], []>} : vector<8x64xbf16>, vector<64x64xbf16>, vector<8x64xf32> -> vector<8x64xf32>
    %c0_9 = arith.constant 0 : index
    %c0_10 = arith.constant 0 : index
    %12 = vector.load %arg6[%c0_9, %c0_10] : memref<1x64xf32, #tpu.memory_space<vmem>>, vector<1x64xf32>
    %13 = vector.broadcast %12 : vector<1x64xf32> to vector<8x64xf32>
    %14 = arith.addf %11, %13 : vector<8x64xf32>
    %15 = arith.truncf %14 : vector<8x64xf32> to vector<8x64xbf16>
    %c0_11 = arith.constant 0 : index
    %c0_12 = arith.constant 0 : index
    %16 = vector.load %arg7[%c0_11, %c0_12] : memref<64x8xbf16, #tpu.memory_space<vmem>>, vector<64x8xbf16>
    %cst_13 = arith.constant dense<0.000000e+00> : vector<8x8xf32>
    %17 = tpu.matmul %15, %16, %cst_13 {dimension_numbers = #tpu.dot_dimension_numbers<[1], [0], [0], [1], [0, 0, 1, 1], [], []>} : vector<8x64xbf16>, vector<64x8xbf16>, vector<8x8xf32> -> vector<8x8xf32>
    %c0_14 = arith.constant 0 : index
    %c0_15 = arith.constant 0 : index
    %18 = vector.load %arg8[%c0_14, %c0_15] : memref<1x8xf32, #tpu.memory_space<vmem>>, vector<1x8xf32>
    %19 = vector.broadcast %18 : vector<1x8xf32> to vector<8x8xf32>
    %20 = arith.addf %17, %19 : vector<8x8xf32>
    %21 = math.tanh %20 : vector<8x8xf32>
    %c0_16 = arith.constant 0 : index
    %c0_17 = arith.constant 0 : index
    %22 = vector.load %arg9[%c0_16, %c0_17] : memref<8x8xf32, #tpu.memory_space<vmem>>, vector<8x8xf32>
    tpu.vector_store %arg9[%c0_16, %c0_17], %21 {strides = array<i32>} : memref<8x8xf32, #tpu.memory_space<vmem>>, vector<8x8xf32>,
    return
  }
  func.func @transform_0(%arg0: i32, %arg1: memref<1xi32, #tpu.memory_space<smem>>) -> (i32, i32) {
    %c0_i32 = arith.constant 0 : i32
    %c0_i32_0 = arith.constant 0 : i32
    return %arg0, %c0_i32 : i32, i32
  }
  func.func @transform_1(%arg0: i32, %arg1: memref<1xi32, #tpu.memory_space<smem>>) -> (i32, i32) {
    %c0_i32 = arith.constant 0 : i32
    %c0_i32_0 = arith.constant 0 : i32
    %c0_i32_1 = arith.constant 0 : i32
    return %c0_i32, %c0_i32_0 : i32, i32
  }
  func.func @transform_2(%arg0: i32, %arg1: memref<1xi32, #tpu.memory_space<smem>>) -> (i32, i32) {
    %c0_i32 = arith.constant 0 : i32
    %c0_i32_0 = arith.constant 0 : i32
    %c0_i32_1 = arith.constant 0 : i32
    return %c0_i32, %c0_i32_0 : i32, i32
  }
  func.func @transform_3(%arg0: i32, %arg1: memref<1xi32, #tpu.memory_space<smem>>) -> (i32, i32) {
    %c0_i32 = arith.constant 0 : i32
    %c0_i32_0 = arith.constant 0 : i32
    %c0_i32_1 = arith.constant 0 : i32
    return %c0_i32, %c0_i32_0 : i32, i32
  }
  func.func @transform_4(%arg0: i32, %arg1: memref<1xi32, #tpu.memory_space<smem>>) -> (i32, i32) {
    %c0_i32 = arith.constant 0 : i32
    %c0_i32_0 = arith.constant 0 : i32
    %c0_i32_1 = arith.constant 0 : i32
    return %c0_i32, %c0_i32_0 : i32, i32
  }
  func.func @transform_5(%arg0: i32, %arg1: memref<1xi32, #tpu.memory_space<smem>>) -> (i32, i32) {
    %c0_i32 = arith.constant 0 : i32
    %c0_i32_0 = arith.constant 0 : i32
    %c0_i32_1 = arith.constant 0 : i32
    return %c0_i32, %c0_i32_0 : i32, i32
  }
  func.func @transform_6(%arg0: i32, %arg1: memref<1xi32, #tpu.memory_space<smem>>) -> (i32, i32) {
    %c0_i32 = arith.constant 0 : i32
    %c0_i32_0 = arith.constant 0 : i32
    %c0_i32_1 = arith.constant 0 : i32
    return %c0_i32, %c0_i32_0 : i32, i32
  }
  func.func @transform_7(%arg0: i32, %arg1: memref<1xi32, #tpu.memory_space<smem>>) -> (i32, i32) {
    %c0_i32 = arith.constant 0 : i32
    %c0_i32_0 = arith.constant 0 : i32
    return %arg0, %c0_i32 : i32, i32
  }
}

</mosaic_0001>

<llo_original>
// kernel: tpu_custom_call.1
$region0: #{tpu_custom_call.1}
  #allocation0 [shape = 'u32[]', space=smem, size = 0x4, offset = 0x4, fixed_abs, tag = 'smem constant byte address 0x4 - core index']
  #allocation1 [shape = 'u32[72,128]{1,0:T(1,128)}', space=vmem, size = 0x9000, scoped, tag = 'internal scratch']
  #allocation2 [shape = 's32[1]{0}', space=sflag, size = 0x4, scoped, tag = 'scoped memory for tpu_custom_call.1']
  #allocation3 [shape = 's32[1]{0:T(128)S(6)}', space=smem, size = 0x200, scoped, tag = 'prefetched SMEM operand 0']
  %s0 = inlined_call_operand.<no memory space> [shape: s32[1], index: 0, kind: input, shape index: {}]
  %s1 = inlined_call_operand.vmem [shape: f32[8,32], index: 1, kind: input, shape index: {}]
  %s2 = inlined_call_operand.hbm [shape: bf16[32,64], index: 2, kind: input, shape index: {}]
  %s3 = inlined_call_operand.hbm [shape: f32[1,64], index: 3, kind: input, shape index: {}]
  %s4 = inlined_call_operand.vmem [shape: bf16[64,64], index: 4, kind: input, shape index: {}]
  %s5 = inlined_call_operand.vmem [shape: f32[1,64], index: 5, kind: input, shape index: {}]
  %s6 = inlined_call_operand.vmem [shape: bf16[64,8], index: 6, kind: input, shape index: {}]
  %s7 = inlined_call_operand.vmem [shape: f32[1,8], index: 7, kind: input, shape index: {}]
  %s8 = inlined_call_operand.hbm [shape: f32[8,8], index: 8, kind: output, shape index: {}]
  %s9 = sld [smem:[#allocation0]]
  $region46: #{tpu_custom_call.1} parent=0
    _
  %s11 = ssub.s32 1, %s9
  %s12 = scalar_select 0, %s11, %s9
  %13 = sst [smem:[#allocation3]] %s0
  $region1: #{tpu_custom_call.1} parent=0
    #allocation4 [shape = 'u8[8192]{0}', space=vmem, size = 0x2000, scoped, tag = 'input window, operand 2, single buffered']
    #allocation5 [shape = 's32[1]{0}', space=sflag, size = 0x4, scoped, tag = 'scoped memory for tpu_custom_call.1']
    #allocation6 [shape = 's32[1]{0}', space=sflag, size = 0x4, scoped, tag = 'scoped memory for tpu_custom_call.1']
    #allocation7 [shape = 'u8[512]{0}', space=vmem, size = 0x400, scoped, tag = 'input window, operand 3, single buffered']
    #allocation8 [shape = 's32[1]{0}', space=sflag, size = 0x4, scoped, tag = 'scoped memory for tpu_custom_call.1']
    #allocation9 [shape = 'u8[4096]{0}', space=vmem, size = 0x1000, scoped, tag = 'output window, operand 0, single buffered']
    %14 = vsyncpa [#allocation5], 0
    %15 = vsyncpa [#allocation8], 0
    %16 = vsyncpa [#allocation6], 0
    // Predicated region
    $region2: #{tpu_custom_call.1} parent=1 // pred_check
      _
    $region3: #{tpu_custom_call.1} parent=1 // pred_check_branch
      %18 = sbr.rel (0) target = $region5
    $region4: #{tpu_custom_call.1} parent=1 // pred_region
      _
    $region5: #{tpu_custom_call.1} parent=1 // pred_fallthru
      _
    // Predicated region
    $region6: #{tpu_custom_call.1} parent=1 // pred_check
      _
    $region7: #{tpu_custom_call.1} parent=1 // pred_check_branch
      %20 = sbr.rel (0) target = $region9
    $region8: #{tpu_custom_call.1} parent=1 // pred_region
      %22 = vsyncadd [#allocation5], 0
      %s23 = sshll.u32 %s2, 4
      %s24 = int_to_ptr.hbm [resolvable:$true] %s23
      %s25 = sshll.u32 [#allocation4], 4
      %s26 = int_to_ptr.vmem [resolvable:$true] %s25
      %31 = dma.hbm_to_vmem [thread:$0]  %s24, 256, %s26, [#allocation5], 64, 64, 4
    $region9: #{tpu_custom_call.1} parent=1 // pred_fallthru
      _
    // Predicated region
    $region10: #{tpu_custom_call.1} parent=1 // pred_check
      _
    $region11: #{tpu_custom_call.1} parent=1 // pred_check_branch
      %33 = sbr.rel (0) target = $region13
    $region12: #{tpu_custom_call.1} parent=1 // pred_region
      %35 = vsyncadd [#allocation8], 0
      %s37 = sshll.u32 %s3, 4
      %s38 = int_to_ptr.hbm [resolvable:$true] %s37
      %s39 = sshll.u32 [#allocation7], 4
      %s40 = int_to_ptr.vmem [resolvable:$true] %s39
      %42 = dma.hbm_to_vmem [thread:$0]  %s38, 16, %s40, [#allocation8]
    $region13: #{tpu_custom_call.1} parent=1 // pred_fallthru
      _
    // Predicated region
    $region14: #{tpu_custom_call.1} parent=1 // pred_check
      _
    $region15: #{tpu_custom_call.1} parent=1 // pred_check_branch
      %44 = sbr.rel (0) target = $region17
    $region16: #{tpu_custom_call.1} parent=1 // pred_region
      _
    $region17: #{tpu_custom_call.1} parent=1 // pred_fallthru
      _
    // Predicated region
    $region18: #{tpu_custom_call.1} parent=1 // pred_check
      _
    $region19: #{tpu_custom_call.1} parent=1 // pred_check_branch
      %46 = sbr.rel (0) target = $region21
    $region20: #{tpu_custom_call.1} parent=1 // pred_region
      _
    $region21: #{tpu_custom_call.1} parent=1 // pred_fallthru
      _
    // Predicated region
    $region22: #{tpu_custom_call.1} parent=1 // pred_check
      _
    $region23: #{tpu_custom_call.1} parent=1 // pred_check_branch
      %48 = sbr.rel (0) target = $region25
    $region24: #{tpu_custom_call.1} parent=1 // pred_region
      _
    $region25: #{tpu_custom_call.1} parent=1 // pred_fallthru
      _
    // Predicated region
    $region26: #{tpu_custom_call.1} parent=1 // pred_check
      _
    $region27: #{tpu_custom_call.1} parent=1 // pred_check_branch
      %50 = sbr.rel (0) target = $region29
    $region28: #{tpu_custom_call.1} parent=1 // pred_region
      _
    $region29: #{tpu_custom_call.1} parent=1 // pred_fallthru
      _
    // Predicated region
    $region30: #{tpu_custom_call.1} parent=1 // pred_check
      _
    $region31: #{tpu_custom_call.1} parent=1 // pred_check_branch
      %52 = sbr.rel (0) target = $region33
    $region32: #{tpu_custom_call.1} parent=1 // pred_region
      %54 = dma.done [#allocation5], 256
    $region33: #{tpu_custom_call.1} parent=1 // pred_fallthru
      _
    // Predicated region
    $region34: #{tpu_custom_call.1} parent=1 // pred_check
      _
    $region35: #{tpu_custom_call.1} parent=1 // pred_check_branch
      %56 = sbr.rel (0) target = $region37
    $region36: #{tpu_custom_call.1} parent=1 // pred_region
      %58 = dma.done [#allocation8], 16
    $region37: #{tpu_custom_call.1} parent=1 // pred_fallthru
      _
    %v60 = vld [vmem:[%s1] sm:$0xff]
    %v61 = vpack.c.bf16 %v60, %v60
    %v62 = vld [vmem:[#allocation4] sm:$0xf]
    %v63 = vld [vmem:[#allocation4 + $0x4] sm:$0xf]
    %v64 = vld [vmem:[#allocation4 + $0x8] sm:$0xf]
    %v65 = vld [vmem:[#allocation4 + $0xc] sm:$0xf]
    %v66 = vld [vmem:[#allocation7] sm:$0x1]
    %v68 = vperm.slane %v66, 0
    %v74 = vunpack.c.l.b16 %v62
    %v75 = vunpack.c.l.b16 %v63
    %v76 = vunpack.c.l.b16 %v64
    %v77 = vunpack.c.l.b16 %v65
    %v78 = vpack.c.b16 %v75, %v74
    %v79 = vpack.c.b16 %v77, %v76
    %vm82 = vcmask 261120
    %v84 = vsel %vm82, %v61, 0
    %86 = vmatpush.bf16.msra.mxu0 0
    %87 = vmatpush.bf16.msra.mxu0 0
    %88 = vmatpush.bf16.msra.mxu0 0
    %89 = vmatpush.bf16.msra.mxu0 0
    %90 = vmatpush.bf16.msra.mxu0 0
    %91 = vmatpush.bf16.msra.mxu0 0
    %92 = vmatpush.bf16.msra.mxu0 %v79
    %93 = vmatpush.bf16.msra.mxu0 %v78
    %94 = vmatmul.bf16.gmra.mxu0 %v84
    %v95 = vpop.f32.mrf.mxu0
    %v96 = vadd.f32 %v68, %v95
    %v97 = vpop.f32.mrf.mxu0
    %98 = vdwg.mxu0
    %v99 = vmax.f32 %v96, 0.0
    %v100 = vpack.c.bf16 %v99, %v99
    %v101 = vld [vmem:[%s4] sm:$0xf]
    %v102 = vld [vmem:[%s4 + $0x4] sm:$0xf]
    %v103 = vld [vmem:[%s4 + $0x8] sm:$0xf]
    %v104 = vld [vmem:[%s4 + $0xc] sm:$0xf]
    %v105 = vld [vmem:[%s4 + $0x10] sm:$0xf]
    %v106 = vld [vmem:[%s4 + $0x14] sm:$0xf]
    %v107 = vld [vmem:[%s4 + $0x18] sm:$0xf]
    %v108 = vld [vmem:[%s4 + $0x1c] sm:$0xf]
    %v109 = vld [vmem:[%s5] sm:$0x1]
    %v111 = vperm.slane %v109, 0
    %v121 = vunpack.c.l.b16 %v101
    %v122 = vunpack.c.l.b16 %v102
    %v123 = vunpack.c.l.b16 %v103
    %v124 = vunpack.c.l.b16 %v104
    %v125 = vunpack.c.l.b16 %v105
    %v126 = vunpack.c.l.b16 %v106
    %v127 = vunpack.c.l.b16 %v107
    %v128 = vunpack.c.l.b16 %v108
    %v129 = vpack.c.b16 %v122, %v121
    %v130 = vpack.c.b16 %v124, %v123
    %v131 = vpack.c.b16 %v126, %v125
    %v132 = vpack.c.b16 %v128, %v127
    %vm137 = vcmask 523264
    %v139 = vsel %vm137, %v100, 0
    %141 = vmatpush.bf16.msra.mxu0 0
    %142 = vmatpush.bf16.msra.mxu0 0
    %143 = vmatpush.bf16.msra.mxu0 0
    %144 = vmatpush.bf16.msra.mxu0 0
    %145 = vmatpush.bf16.msra.mxu0 %v132
    %146 = vmatpush.bf16.msra.mxu0 %v131
    %147 = vmatpush.bf16.msra.mxu0 %v130
    %148 = vmatpush.bf16.msra.mxu0 %v129
    %149 = vmatmul.bf16.gmra.mxu0 %v139
    %v150 = vpop.f32.mrf.mxu0
    %v151 = vadd.f32 %v111, %v150
    %v152 = vpop.f32.mrf.mxu0
    %153 = vdwg.mxu0
    %v154 = vpack.c.bf16 %v151, %v151
    %v155 = vld [vmem:[%s6] sm:$0xf]
    %v156 = vld [vmem:[%s6 + $0x4] sm:$0xf]
    %v157 = vld [vmem:[%s6 + $0x8] sm:$0xf]
    %v158 = vld [vmem:[%s6 + $0xc] sm:$0xf]
    %v159 = vld [vmem:[%s6 + $0x10] sm:$0xf]
    %v160 = vld [vmem:[%s6 + $0x14] sm:$0xf]
    %v161 = vld [vmem:[%s6 + $0x18] sm:$0xf]
    %v162 = vld [vmem:[%s6 + $0x1c] sm:$0xf]
    %v163 = vld [vmem:[%s7] sm:$0x1]
    %v165 = vperm.slane %v163, 0
    %v175 = vunpack.c.l.b16 %v155
    %v176 = vunpack.c.l.b16 %v156
    %v177 = vunpack.c.l.b16 %v157
    %v178 = vunpack.c.l.b16 %v158
    %v179 = vunpack.c.l.b16 %v159
    %v180 = vunpack.c.l.b16 %v160
    %v181 = vunpack.c.l.b16 %v161
    %v182 = vunpack.c.l.b16 %v162
    %v183 = vpack.c.b16 %v176, %v175
    %v184 = vpack.c.b16 %v178, %v177
    %v185 = vpack.c.b16 %v180, %v179
    %v186 = vpack.c.b16 %v182, %v181
    %v192 = vsel %vm137, %v154, 0
    %194 = vmatpush.bf16.msra.mxu0 0
    %195 = vmatpush.bf16.msra.mxu0 0
    %196 = vmatpush.bf16.msra.mxu0 0
    %197 = vmatpush.bf16.msra.mxu0 0
    %198 = vmatpush.bf16.msra.mxu0 %v186
    %199 = vmatpush.bf16.msra.mxu0 %v185
    %200 = vmatpush.bf16.msra.mxu0 %v184
    %201 = vmatpush.bf16.msra.mxu0 %v183
    %202 = vmatmul.bf16.gmra.mxu0 %v192
    %v203 = vpop.f32.mrf.mxu0
    %v204 = vadd.f32 %v165, %v203
    %v205 = vpop.f32.mrf.mxu0
    %206 = vdwg.mxu0
    %v207 = vtanh.pop %v204
    %vm208 = vcmask 64512
    %209 = vst.msk [vmem:[#allocation9] sm:$0xff] %vm208, %v207
    // Predicated region
    $region38: #{tpu_custom_call.1} parent=1 // pred_check
      _
    $region39: #{tpu_custom_call.1} parent=1 // pred_check_branch
      %211 = sbr.rel (0) target = $region41
    $region40: #{tpu_custom_call.1} parent=1 // pred_region
      %213 = vsyncadd [#allocation6], 0
      %s215 = sshll.u32 [#allocation9], 4
      %s216 = int_to_ptr.vmem [resolvable:$true] %s215
      %s217 = sshll.u32 %s8, 4
      %s218 = int_to_ptr.hbm [resolvable:$true] %s217
      %220 = dma.vmem_to_hbm [thread:$0]  %s216, 128, %s218, [#allocation6]
    $region41: #{tpu_custom_call.1} parent=1 // pred_fallthru
      _
    // Predicated region
    $region42: #{tpu_custom_call.1} parent=1 // pred_check
      _
    $region43: #{tpu_custom_call.1} parent=1 // pred_check_branch
      %222 = sbr.rel (0) target = $region45
    $region44: #{tpu_custom_call.1} parent=1 // pred_region
      %224 = dma.done [#allocation6], 128
    $region45: #{tpu_custom_call.1} parent=1 // pred_fallthru
      _
    %225 = vsyncpa [#allocation5], 1
    %226 = vsyncpa [#allocation8], 1
    %227 = vsyncpa [#allocation6], 1

</llo_original>
